<compile_context>
chip_gen: v6e
topology: v6e:2x2x1
jax: 0.10.0
libtpu: 0.0.40
codegen_flags: <defaults>
</compile_context>

<pallas_src>
from functools import partial

import jax
import jax.numpy as jnp
from jax.experimental import pallas as pl
from jax.experimental.pallas import tpu as pltpu

TEMP = 0.07
MOMENTUM = 0.2
K_SAMPLE = 8192       # self.K; num_samples <= K here, so every negative is kept
NEG_FILL = -1e30      # masked-logit fill (finite, avoids inf-inf NaNs)
LANE = 128            # TPU lane width


# ---------------------------------------------------------------------------
# Kernel: streamed, masked online log-sum-exp over the negatives.
# Grid = (num_cores, tiles_per_core); outputs are per-core lane-partial
# (running max, running exp-sum) accumulated directly in the output blocks.
# ---------------------------------------------------------------------------
def memory_lse_kernel(fnv_ref, blab_ref, bank_ref, labels_ref, m_ref, s_ref):
    j = pl.program_id(1)

    @pl.when(j == 0)
    def _init():
        m_ref[...] = jnp.full(m_ref.shape, jnp.float32(NEG_FILL), jnp.float32)
        s_ref[...] = jnp.zeros(s_ref.shape, jnp.float32)

    inv_t = jnp.float32(1.0 / TEMP)
    fnv = fnv_ref[...]                                   # [B, D] f32 (resident)
    bank = bank_ref[...]                                 # [TN, D] f32 (streamed)
    dims = (((1,), (1,)), ((), ()))                      # contract feature dim
    s = jax.lax.dot_general(fnv, bank, dims,
                            preferred_element_type=jnp.float32)      # [B, TN]

    # Fold the negatives mask into one additive bias (single select/elem).
    # A row with no negatives at all ends with m == NEG_FILL; its spurious
    # exp-sum is multiplied by exp(NEG_FILL - pos) == 0 in the glue CE, so the
    # degenerate case still yields loss 0 (only the positive class).
    neg_mask = labels_ref[...] != blab_ref[...]          # [B, TN]
    sm = s * inv_t + jnp.where(neg_mask, jnp.float32(0.0), jnp.float32(NEG_FILL))

    # Lane-partial online LSE: per-lane running max / exp-sum (pure VPU work);
    # the single cross-lane reduction happens once in glue.
    m_run = m_ref[0]                                     # [B, LANE]
    s_run = s_ref[0]
    groups = bank_ref.shape[0] // LANE
    for g in range(groups):                              # static, unrolled
        blk = sm[:, g * LANE:(g + 1) * LANE]             # [B, LANE] lane slice
        m_new = jnp.maximum(m_run, blk)
        s_run = s_run * jnp.exp(m_run - m_new) + jnp.exp(blk - m_new)
        m_run = m_new
    m_ref[0] = m_run
    s_ref[0] = s_run


# ---------------------------------------------------------------------------
# Glue
# ---------------------------------------------------------------------------
def _vmem_capacity_bytes():
    try:
        cap = getattr(pltpu.get_tpu_info(), "vmem_capacity_bytes", None)
        if cap:
            return int(cap)
    except Exception:
        pass
    return 64 * 1024 * 1024   # conservative fallback (v7x per-core VMEM)


def _choose_tile_n(n, d, b, vmem_bytes):
    """Largest bank tile (rows) s.t. the double-buffered f32 bank tile PLUS the
    [B, tile_n] f32 logits/exp temporaries fit in ~60% of VMEM."""
    budget = int(vmem_bytes * 0.6)
    per_row = 2 * d * 4 + 4 * b * 4 + 2 * 4   # 2x f32 bank row + ~4 f32 temps + labels
    tn = max(LANE, (budget // max(per_row, 1)) // LANE * LANE)
    tn = min(tn, n)
    while tn > LANE and n % tn != 0:
        tn -= LANE
    return tn


@partial(jax.jit, static_argnames=("tile_n",), donate_argnums=(0,))
def memory_forward(features, labels, f, f_nv, indexes, pos_sim_idx, pos_wog_idx,
                   *, tile_n=None):
    B, D = f.shape
    N = features.shape[0]
    # TODO(synk): pad the bank (with a column-validity mask) for N % 128 != 0.
    assert N % LANE == 0, N
    vmem_bytes = _vmem_capacity_bytes()
    if tile_n is None:
        tile_n = _choose_tile_n(N, D, B, vmem_bytes)
    assert N % tile_n == 0 and tile_n % LANE == 0, (N, tile_n)

    n_tiles = N // tile_n
    nc = 2 if (n_tiles % 2 == 0 and n_tiles >= 2) else 1   # dual-TC split (v7x)
    k_per_core = n_tiles // nc

    blab = labels[indexes].reshape(B, 1).astype(jnp.int32)
    labels_2d = labels.reshape(1, N).astype(jnp.int32)

    resident = lambda c, j: (0, 0)
    m_part, s_part = pl.pallas_call(
        memory_lse_kernel,
        out_shape=(jax.ShapeDtypeStruct((nc, B, LANE), jnp.float32),
                   jax.ShapeDtypeStruct((nc, B, LANE), jnp.float32)),
        grid_spec=pltpu.PrefetchScalarGridSpec(
            num_scalar_prefetch=0,
            grid=(nc, k_per_core),
            in_specs=[
                pl.BlockSpec((B, D), resident),                     # f_nv (resident)
                pl.BlockSpec((B, 1), resident),                     # labels[indexes]
                pl.BlockSpec((tile_n, D),
                             lambda c, j: (c * k_per_core + j, 0)),  # bank tile (f32)
                pl.BlockSpec((1, tile_n),
                             lambda c, j: (0, c * k_per_core + j)),  # labels tile
            ],
            out_specs=[pl.BlockSpec((1, B, LANE), lambda c, j: (c, 0, 0)),
                       pl.BlockSpec((1, B, LANE), lambda c, j: (c, 0, 0))],
        ),
        compiler_params=pltpu.CompilerParams(
            dimension_semantics=("parallel", "arbitrary"),
            vmem_limit_bytes=int(vmem_bytes * 0.8)),
    )(f_nv, blab, features, labels_2d)

    # Combine per-core, per-lane partial LSE (one small cross-lane reduce).
    m_neg = jnp.max(m_part, axis=(0, 2))                                    # [B]
    s_neg = jnp.sum(s_part * jnp.exp(m_part - m_neg[None, :, None]), axis=(0, 2))

    # Positive logits: tiny B x D rowwise dots (done in glue, O(B*D)).
    inv_t = 1.0 / TEMP
    w_pos = features[indexes]            # rows for l_pos and the momentum update
    l_pos = jnp.sum(f_nv * w_pos, axis=1) * inv_t
    pos_sim = jnp.sum(f_nv * features[pos_sim_idx], axis=1) * inv_t
    pos_wog = jnp.sum(f * features[pos_wog_idx], axis=1) * inv_t

    def ce(pos):                         # cross-entropy with the positive at class 0
        m = jnp.maximum(pos, m_neg)
        z = jnp.exp(pos - m) + s_neg * jnp.exp(m_neg - m)
        return jnp.mean(m + jnp.log(z) - pos)

    loss = ce(l_pos) + ce(pos_sim) + ce(pos_wog)

    # Momentum update + L2 normalize; in-place scatter on the DONATED buffer
    # (no second N x D copy).  Duplicate `indexes` are "unspecified-wins", like
    # the reference (torch index_copy_ ordering is sequential).
    w = MOMENTUM * w_pos + (1.0 - MOMENTUM) * f
    w = w * jax.lax.rsqrt(jnp.maximum(jnp.sum(w * w, axis=1, keepdims=True), 1e-24))
    new_features = features.at[indexes].set(w)
    return loss, new_features


def choose_positive_indices(key, labels, batch_labels):
    """Deterministic stand-in for torch.randperm(...)[:1] over the positive set."""
    n = labels.shape[0]

    def choose(k, bl):
        scores = jax.random.uniform(k, (n,))
        scores = jnp.where(labels == bl, scores, -1.0)
        return jnp.argmax(scores).astype(jnp.int32)

    keys = jax.random.split(key, batch_labels.shape[0])
    return jax.vmap(choose)(keys, batch_labels)


# ---------------------------------------------------------------------------
# Pure-JAX reference
# ---------------------------------------------------------------------------
def reference(features, labels, f, f_nv, indexes, pos_sim_idx, pos_wog_idx):
    inv_t = 1.0 / TEMP
    mat_sim = f_nv @ features.T
    batch_labels = labels[indexes]
    neg_mask = labels[None, :] != batch_labels[:, None]
    l_pos = jnp.sum(f_nv * features[indexes], axis=1) * inv_t
    pos_sim = jnp.sum(f_nv * features[pos_sim_idx], axis=1) * inv_t
    pos_wog = jnp.sum(f * features[pos_wog_idx], axis=1) * inv_t
    neg_logits = jnp.where(neg_mask, mat_sim * inv_t, NEG_FILL)

    def ce(p):
        lse = jax.scipy.special.logsumexp(
            jnp.concatenate([p[:, None], neg_logits], axis=1), axis=1)
        return jnp.mean(lse - p)

    loss = ce(l_pos) + ce(pos_sim) + ce(pos_wog)
    w = MOMENTUM * features[indexes] + (1.0 - MOMENTUM) * f
    w = w * jax.lax.rsqrt(jnp.maximum(jnp.sum(w * w, axis=1, keepdims=True), 1e-24))
    new_features = features.at[indexes].set(w)
    return loss, new_features


if __name__ == "__main__":
    B, D, N, NUM_CLASSES = 8, 64, 512, 8   # batch, num_features, num_samples

    key = jax.random.PRNGKey(0)
    kf, kfn, kfeat, kidx, ksel = jax.random.split(key, 5)

    features = jax.random.normal(kfeat, (N, D), jnp.float32)
    features = features / jnp.linalg.norm(features, axis=1, keepdims=True)
    labels = (jnp.arange(N, dtype=jnp.int32) % NUM_CLASSES)   # balanced classes

    f = jax.random.normal(kf, (B, D), jnp.float32)
    f = f / jnp.linalg.norm(f, axis=1, keepdims=True)
    f_nv = jax.random.normal(kfn, (B, D), jnp.float32)
    f_nv = f_nv / jnp.linalg.norm(f_nv, axis=1, keepdims=True)
    indexes = jax.random.permutation(kidx, N)[:B].astype(jnp.int32)

    # TODO(synk): torch.randperm-based positive sampling is RNG-state dependent;
    # a deterministic jax.random choice of one positive per row is used instead.
    k_sim, k_wog = jax.random.split(ksel)
    batch_labels = labels[indexes]
    pos_sim_idx = choose_positive_indices(k_sim, labels, batch_labels)
    pos_wog_idx = choose_positive_indices(k_wog, labels, batch_labels)

    # Reference first: `features` is donated (invalidated) by the kernel call.
    ref_loss, ref_features = reference(
        features, labels, f, f_nv, indexes, pos_sim_idx, pos_wog_idx)
    ref_loss = jax.block_until_ready(ref_loss)

    # tile_n=128 -> grid (2 cores x 2 tiles): exercises both the streamed
    # online-LSE accumulation and the dual-core partial combine.
    loss, new_features = memory_forward(
        features, labels, f, f_nv, indexes, pos_sim_idx, pos_wog_idx, tile_n=128)
    loss = jax.block_until_ready(loss)
    new_features = jax.block_until_ready(new_features)

    assert jnp.isfinite(loss), "loss is not finite"
    assert jnp.allclose(loss, ref_loss, rtol=1e-2, atol=1e-2), (loss, ref_loss)
    assert jnp.allclose(new_features, ref_features, rtol=1e-5, atol=1e-5)

    print("KERNEL_OK")
</pallas_src>

<mosaic_0001>
module attributes {stable_mosaic.version = 11 : i64} {
  func.func @memory_lse_kernel(%arg0: i32, %arg1: i32, %arg2: memref<8x64xf32, #tpu.memory_space<vmem>>, %arg3: memref<8x1xi32, #tpu.memory_space<vmem>>, %arg4: memref<128x64xf32, #tpu.memory_space<vmem>>, %arg5: memref<1x128xi32, #tpu.memory_space<vmem>>, %arg6: memref<1x8x128xf32, #tpu.memory_space<vmem>>, %arg7: memref<1x8x128xf32, #tpu.memory_space<vmem>>) attributes {dimension_semantics = [#tpu.dimension_semantics<parallel>, #tpu.dimension_semantics<arbitrary>], iteration_bounds = array<i64: 2, 2>, scalar_prefetch = 0 : i64, scratch_operands = 0 : i64, tpu.core_type = #tpu.core_type<tc>, window_params = [{pipeline_mode = #tpu.pipeline_mode<synchronous>, transform_indices = @transform_0, window_bounds = array<i64: 8, 64>}, {pipeline_mode = #tpu.pipeline_mode<synchronous>, transform_indices = @transform_1, window_bounds = array<i64: 8, 1>}, {transform_indices = @transform_2, window_bounds = array<i64: 128, 64>}, {transform_indices = @transform_3, window_bounds = array<i64: 1, 128>}, {transform_indices = @transform_4, window_bounds = array<i64: 1, 8, 128>}, {transform_indices = @transform_5, window_bounds = array<i64: 1, 8, 128>}]} {
    %c0_i32 = arith.constant 0 : i32
    %0 = arith.cmpi eq, %arg1, %c0_i32 : i32
    %1 = arith.extui %0 : i1 to i32
    %c0_i32_0 = arith.constant 0 : i32
    %2 = arith.cmpi ne, %1, %c0_i32_0 : i32
    scf.if %2 {
      %cst_23 = arith.constant -1.000000e+30 : f32
      %34 = vector.broadcast %cst_23 : f32 to vector<1x8x128xf32>
      %c0_24 = arith.constant 0 : index
      %c0_25 = arith.constant 0 : index
      %c0_26 = arith.constant 0 : index
      %35 = vector.load %arg6[%c0_24, %c0_25, %c0_26] : memref<1x8x128xf32, #tpu.memory_space<vmem>>, vector<1x8x128xf32>
      tpu.vector_store %arg6[%c0_24, %c0_25, %c0_26], %34 {strides = array<i32>} : memref<1x8x128xf32, #tpu.memory_space<vmem>>, vector<1x8x128xf32>,
      %cst_27 = arith.constant 0.000000e+00 : f32
      %36 = vector.broadcast %cst_27 : f32 to vector<1x8x128xf32>
      %c0_28 = arith.constant 0 : index
      %c0_29 = arith.constant 0 : index
      %c0_30 = arith.constant 0 : index
      %37 = vector.load %arg7[%c0_28, %c0_29, %c0_30] : memref<1x8x128xf32, #tpu.memory_space<vmem>>, vector<1x8x128xf32>
      tpu.vector_store %arg7[%c0_28, %c0_29, %c0_30], %36 {strides = array<i32>} : memref<1x8x128xf32, #tpu.memory_space<vmem>>, vector<1x8x128xf32>,
    } else {
    }
    %c0 = arith.constant 0 : index
    %c0_1 = arith.constant 0 : index
    %3 = vector.load %arg2[%c0, %c0_1] : memref<8x64xf32, #tpu.memory_space<vmem>>, vector<8x64xf32>
    %c0_2 = arith.constant 0 : index
    %c0_3 = arith.constant 0 : index
    %4 = vector.load %arg4[%c0_2, %c0_3] : memref<128x64xf32, #tpu.memory_space<vmem>>, vector<128x64xf32>
    %cst = arith.constant dense<0.000000e+00> : vector<8x128xf32>
    %5 = tpu.matmul %3, %4, %cst {dimension_numbers = #tpu.dot_dimension_numbers<[1], [1], [0], [0], [0, 0, 1, 0], [], []>} : vector<8x64xf32>, vector<128x64xf32>, vector<8x128xf32> -> vector<8x128xf32>
    %c0_4 = arith.constant 0 : index
    %c0_5 = arith.constant 0 : index
    %6 = vector.load %arg5[%c0_4, %c0_5] : memref<1x128xi32, #tpu.memory_space<vmem>>, vector<1x128xi32>
    %c0_6 = arith.constant 0 : index
    %c0_7 = arith.constant 0 : index
    %7 = vector.load %arg3[%c0_6, %c0_7] : memref<8x1xi32, #tpu.memory_space<vmem>>, vector<8x1xi32>
    %8 = vector.broadcast %6 : vector<1x128xi32> to vector<8x128xi32>
    %9 = vector.broadcast %7 : vector<8x1xi32> to vector<8x128xi32>
    %10 = arith.cmpi ne, %8, %9 : vector<8x128xi32>
    %cst_8 = arith.constant 14.2857141 : f32
    %11 = vector.broadcast %cst_8 : f32 to vector<8x128xf32>
    %12 = arith.mulf %5, %11 : vector<8x128xf32>
    %cst_9 = arith.constant 0.000000e+00 : f32
    %cst_10 = arith.constant -1.000000e+30 : f32
    %13 = vector.broadcast %cst_9 : f32 to vector<8x128xf32>
    %14 = vector.broadcast %cst_10 : f32 to vector<8x128xf32>
    %15 = arith.select %10, %13, %14 : vector<8x128xi1>, vector<8x128xf32>
    %16 = arith.addf %12, %15 : vector<8x128xf32>
    %c0_11 = arith.constant 0 : index
    %c0_12 = arith.constant 0 : index
    %c0_13 = arith.constant 0 : index
    %17 = vector.load %arg6[%c0_11, %c0_12, %c0_13] : memref<1x8x128xf32, #tpu.memory_space<vmem>>, vector<1x8x128xf32>
    %18 = vector.shape_cast %17 : vector<1x8x128xf32> to vector<8x128xf32>
    %c0_14 = arith.constant 0 : index
    %c0_15 = arith.constant 0 : index
    %c0_16 = arith.constant 0 : index
    %19 = vector.load %arg7[%c0_14, %c0_15, %c0_16] : memref<1x8x128xf32, #tpu.memory_space<vmem>>, vector<1x8x128xf32>
    %20 = vector.shape_cast %19 : vector<1x8x128xf32> to vector<8x128xf32>
    %21 = arith.maximumf %18, %16 : vector<8x128xf32>
    %22 = arith.subf %18, %21 : vector<8x128xf32>
    %23 = math.exp %22 : vector<8x128xf32>
    %24 = arith.mulf %20, %23 : vector<8x128xf32>
    %25 = arith.subf %16, %21 : vector<8x128xf32>
    %26 = math.exp %25 : vector<8x128xf32>
    %27 = arith.addf %24, %26 : vector<8x128xf32>
    %c0_17 = arith.constant 0 : index
    %c0_18 = arith.constant 0 : index
    %c0_19 = arith.constant 0 : index
    %28 = vector.load %arg6[%c0_17, %c0_18, %c0_19] : memref<1x8x128xf32, #tpu.memory_space<vmem>>, vector<1x8x128xf32>
    %29 = vector.shape_cast %28 : vector<1x8x128xf32> to vector<8x128xf32>
    %30 = vector.shape_cast %21 : vector<8x128xf32> to vector<1x8x128xf32>
    tpu.vector_store %arg6[%c0_17, %c0_18, %c0_19], %30 {strides = array<i32>} : memref<1x8x128xf32, #tpu.memory_space<vmem>>, vector<1x8x128xf32>,
    %c0_20 = arith.constant 0 : index
    %c0_21 = arith.constant 0 : index
    %c0_22 = arith.constant 0 : index
    %31 = vector.load %arg7[%c0_20, %c0_21, %c0_22] : memref<1x8x128xf32, #tpu.memory_space<vmem>>, vector<1x8x128xf32>
    %32 = vector.shape_cast %31 : vector<1x8x128xf32> to vector<8x128xf32>
    %33 = vector.shape_cast %27 : vector<8x128xf32> to vector<1x8x128xf32>
    tpu.vector_store %arg7[%c0_20, %c0_21, %c0_22], %33 {strides = array<i32>} : memref<1x8x128xf32, #tpu.memory_space<vmem>>, vector<1x8x128xf32>,
    return
  }
  func.func @transform_0(%arg0: i32, %arg1: i32) -> (i32, i32) {
    %c0_i32 = arith.constant 0 : i32
    %c0_i32_0 = arith.constant 0 : i32
    %c0_i32_1 = arith.constant 0 : i32
    return %c0_i32, %c0_i32_0 : i32, i32
  }
  func.func @transform_1(%arg0: i32, %arg1: i32) -> (i32, i32) {
    %c0_i32 = arith.constant 0 : i32
    %c0_i32_0 = arith.constant 0 : i32
    %c0_i32_1 = arith.constant 0 : i32
    return %c0_i32, %c0_i32_0 : i32, i32
  }
  func.func @transform_2(%arg0: i32, %arg1: i32) -> (i32, i32) {
    %c2_i32 = arith.constant 2 : i32
    %0 = arith.muli %arg0, %c2_i32 : i32
    %1 = arith.addi %0, %arg1 : i32
    %c0_i32 = arith.constant 0 : i32
    %c0_i32_0 = arith.constant 0 : i32
    return %1, %c0_i32 : i32, i32
  }
  func.func @transform_3(%arg0: i32, %arg1: i32) -> (i32, i32) {
    %c2_i32 = arith.constant 2 : i32
    %0 = arith.muli %arg0, %c2_i32 : i32
    %1 = arith.addi %0, %arg1 : i32
    %c0_i32 = arith.constant 0 : i32
    %c0_i32_0 = arith.constant 0 : i32
    return %c0_i32, %1 : i32, i32
  }
  func.func @transform_4(%arg0: i32, %arg1: i32) -> (i32, i32, i32) {
    %c0_i32 = arith.constant 0 : i32
    %c0_i32_0 = arith.constant 0 : i32
    %c0_i32_1 = arith.constant 0 : i32
    return %arg0, %c0_i32, %c0_i32_0 : i32, i32, i32
  }
  func.func @transform_5(%arg0: i32, %arg1: i32) -> (i32, i32, i32) {
    %c0_i32 = arith.constant 0 : i32
    %c0_i32_0 = arith.constant 0 : i32
    %c0_i32_1 = arith.constant 0 : i32
    return %arg0, %c0_i32, %c0_i32_0 : i32, i32, i32
  }
}

</mosaic_0001>

<llo_original>
// kernel: memory_forward.1
$region0: #{memory_forward.1}
  #allocation0 [shape = 'u32[]', space=smem, size = 0x4, offset = 0x4, fixed_abs, tag = 'smem constant byte address 0x4 - core index']
  #allocation1 [shape = 'u32[144,128]{1,0:T(1,128)}', space=vmem, size = 0x12000, scoped, tag = 'internal scratch']
  %s0 = inlined_call_operand.vmem [shape: f32[8,64], index: 0, kind: input, shape index: {}]
  %s1 = inlined_call_operand.vmem [shape: s32[8,1], index: 1, kind: input, shape index: {}]
  %s2 = inlined_call_operand.vmem [shape: f32[512,64], index: 2, kind: input, shape index: {}]
  %s3 = inlined_call_operand.vmem [shape: s32[1,512], index: 3, kind: input, shape index: {}]
  %s4 = inlined_call_operand.vmem [shape: f32[2,8,128], index: 4, kind: output, shape index: {0}]
  %s5 = inlined_call_operand.vmem [shape: f32[2,8,128], index: 5, kind: output, shape index: {1}]
  %6 = xla_tuple %s4, %s5
  %s7 = sld [smem:[#allocation0]]
  $region61: #{memory_forward.1} parent=0
    _
  %s9 = ssub.s32 1, %s7
  %s10 = scalar_select 0, %s9, %s7
  loop: start=0, step=1, limit=6
  $region2: #{memory_forward.1} parent=0 // loop_pre_header
    _
  $region3: #{memory_forward.1} parent=0 // loop_header
    %s12 = sphi 0, %s16
    %p13 = scmp.ge.s32.totalorder %s12, 6
    %s19 = sphi 0, %s31
    %s20 = sphi 0, %s27
    %s21 = sphi 0, %s19
    %s22 = sphi 0, %s20
    %s23 = sphi 0, %s21
    %s24 = sphi 0, %s22
    %s32 = sphi 0, %s32
    %s34 = sphi 0, %s32
    %s35 = sphi 0, %s34
    %s49 = sphi 0, %s35
    %s53 = sphi 0, %s53
    %s55 = sphi 0, %s53
    %s56 = sphi 0, %s55
    %s70 = sphi 0, %s56
    %s80 = sphi 0, %s82
    %s83 = sphi 0, %s80
    %s84 = sphi 0, %s83
    %s100 = sphi 0, %s84
    %s110 = sphi 0, %s112
    %s113 = sphi 0, %s110
    %s114 = sphi 0, %s113
    %s130 = sphi 0, %s114
    %s136 = sphi 0, %s138
    %s139 = sphi 0, %s136
    %s140 = sphi 0, %s139
    %s156 = sphi 0, %s140
    %s162 = sphi 0, %s164
    %s165 = sphi 0, %s162
    %s166 = sphi 0, %s165
    %s182 = sphi 0, %s166
  $region4: #{memory_forward.1} parent=0 // loop_header_branch
    %15 = sbr.rel (%p13) target = $region8
  $region5: #{memory_forward.1} parent=0 // loop_body
    %s17 = ssub.s32 %s12, 1
    %s18 = ssub.s32 %s12, 2
    %s25 = sadd.s32 1, %s20
    %p26 = scmp.ge.s32.totalorder %s25, 2
    %s27 = scalar_select %p26, 0, %s25
    %s28 = sadd.s32 1, %s19
    %s29 = scalar_select %p26, %s28, %s19
    %p30 = scmp.ge.s32.totalorder %s29, 2
    %s31 = scalar_select %p30, 0, %s29
    %s33 = sadd.s32 %s32, 1
    %p36 = scmp.eq.s32.totalorder %s12, 3
    %p37 = scmp.ne.s32.totalorder %s32, %s34
    %p38 = scmp.eq.s32.totalorder %s12, 0
    %p39 = por %p37, %p38
    %p40 = scmp.ne.s32.totalorder %s32, %s34
    %p41 = scmp.eq.s32.totalorder %s17, 3
    %p42 = por %p40, %p41
    %p43 = scmp.ne.s32.totalorder %s34, %s35
    %p44 = scmp.eq.s32.totalorder %s17, 0
    %p45 = por %p43, %p44
    %p46 = scmp.ne.s32.totalorder %s34, %s35
    %p47 = scmp.eq.s32.totalorder %s18, 3
    %p48 = por %p46, %p47
    %p50 = scmp.ne.s32.totalorder %s35, %s49
    %p51 = scmp.eq.s32.totalorder %s18, 0
    %p52 = por %p50, %p51
    %s54 = sadd.s32 %s53, 1
    %p57 = scmp.eq.s32.totalorder %s12, 3
    %p58 = scmp.ne.s32.totalorder %s53, %s55
    %p59 = scmp.eq.s32.totalorder %s12, 0
    %p60 = por %p58, %p59
    %p61 = scmp.ne.s32.totalorder %s53, %s55
    %p62 = scmp.eq.s32.totalorder %s17, 3
    %p63 = por %p61, %p62
    %p64 = scmp.ne.s32.totalorder %s55, %s56
    %p65 = scmp.eq.s32.totalorder %s17, 0
    %p66 = por %p64, %p65
    %p67 = scmp.ne.s32.totalorder %s55, %s56
    %p68 = scmp.eq.s32.totalorder %s18, 3
    %p69 = por %p67, %p68
    %p71 = scmp.ne.s32.totalorder %s56, %s70
    %p72 = scmp.eq.s32.totalorder %s18, 0
    %p73 = por %p71, %p72
    %s74 = smul.u32 %s19, 2
    %s75 = sadd.s32 %s74, %s20
    %s76 = smul.u32 %s31, 2
    %s77 = sadd.s32 %s76, %s27
    %s78 = ssub.s32 %s75, %s77
    %p79 = scmp.eq.s32.totalorder %s78, 0
    %s81 = sadd.s32 %s80, 1
    %s82 = scalar_select %p79, %s80, %s81
    %p85 = pneg %p79
    %p86 = scmp.eq.s32.totalorder %s12, 3
    %p87 = por %p85, %p86
    %p88 = scmp.ne.s32.totalorder %s80, %s83
    %p89 = scmp.eq.s32.totalorder %s12, 0
    %p90 = por %p88, %p89
    %p91 = scmp.ne.s32.totalorder %s80, %s83
    %p92 = scmp.eq.s32.totalorder %s17, 3
    %p93 = por %p91, %p92
    %p94 = scmp.ne.s32.totalorder %s83, %s84
    %p95 = scmp.eq.s32.totalorder %s17, 0
    %p96 = por %p94, %p95
    %p97 = scmp.ne.s32.totalorder %s83, %s84
    %p98 = scmp.eq.s32.totalorder %s18, 3
    %p99 = por %p97, %p98
    %p101 = scmp.ne.s32.totalorder %s84, %s100
    %p102 = scmp.eq.s32.totalorder %s18, 0
    %p103 = por %p101, %p102
    %s104 = smul.u32 %s19, 2
    %s105 = sadd.s32 %s104, %s20
    %s106 = smul.u32 %s31, 2
    %s107 = sadd.s32 %s106, %s27
    %s108 = ssub.s32 %s105, %s107
    %p109 = scmp.eq.s32.totalorder %s108, 0
    %s111 = sadd.s32 %s110, 1
    %s112 = scalar_select %p109, %s110, %s111
    %p115 = pneg %p109
    %p116 = scmp.eq.s32.totalorder %s12, 3
    %p117 = por %p115, %p116
    %p118 = scmp.ne.s32.totalorder %s110, %s113
    %p119 = scmp.eq.s32.totalorder %s12, 0
    %p120 = por %p118, %p119
    %p121 = scmp.ne.s32.totalorder %s110, %s113
    %p122 = scmp.eq.s32.totalorder %s17, 3
    %p123 = por %p121, %p122
    %p124 = scmp.ne.s32.totalorder %s113, %s114
    %p125 = scmp.eq.s32.totalorder %s17, 0
    %p126 = por %p124, %p125
    %p127 = scmp.ne.s32.totalorder %s113, %s114
    %p128 = scmp.eq.s32.totalorder %s18, 3
    %p129 = por %p127, %p128
    %p131 = scmp.ne.s32.totalorder %s114, %s130
    %p132 = scmp.eq.s32.totalorder %s18, 0
    %p133 = por %p131, %p132
    %s134 = ssub.s32 %s19, %s31
    %p135 = scmp.eq.s32.totalorder %s134, 0
    %s137 = sadd.s32 %s136, 1
    %s138 = scalar_select %p135, %s136, %s137
    %p141 = pneg %p135
    %p142 = scmp.eq.s32.totalorder %s12, 3
    %p143 = por %p141, %p142
    %p144 = scmp.ne.s32.totalorder %s136, %s139
    %p145 = scmp.eq.s32.totalorder %s12, 0
    %p146 = por %p144, %p145
    %p147 = scmp.ne.s32.totalorder %s136, %s139
    %p148 = scmp.eq.s32.totalorder %s17, 3
    %p149 = por %p147, %p148
    %p150 = scmp.ne.s32.totalorder %s139, %s140
    %p151 = scmp.eq.s32.totalorder %s17, 0
    %p152 = por %p150, %p151
    %p153 = scmp.ne.s32.totalorder %s139, %s140
    %p154 = scmp.eq.s32.totalorder %s18, 3
    %p155 = por %p153, %p154
    %p157 = scmp.ne.s32.totalorder %s140, %s156
    %p158 = scmp.eq.s32.totalorder %s18, 0
    %p159 = por %p157, %p158
    %s160 = ssub.s32 %s19, %s31
    %p161 = scmp.eq.s32.totalorder %s160, 0
    %s163 = sadd.s32 %s162, 1
    %s164 = scalar_select %p161, %s162, %s163
    %p167 = pneg %p161
    %p168 = scmp.eq.s32.totalorder %s12, 3
    %p169 = por %p167, %p168
    %p170 = scmp.ne.s32.totalorder %s162, %s165
    %p171 = scmp.eq.s32.totalorder %s12, 0
    %p172 = por %p170, %p171
    %p173 = scmp.ne.s32.totalorder %s162, %s165
    %p174 = scmp.eq.s32.totalorder %s17, 3
    %p175 = por %p173, %p174
    %p176 = scmp.ne.s32.totalorder %s165, %s166
    %p177 = scmp.eq.s32.totalorder %s17, 0
    %p178 = por %p176, %p177
    %p179 = scmp.ne.s32.totalorder %s165, %s166
    %p180 = scmp.eq.s32.totalorder %s18, 3
    %p181 = por %p179, %p180
    %p183 = scmp.ne.s32.totalorder %s166, %s182
    %p184 = scmp.eq.s32.totalorder %s18, 0
    %p185 = por %p183, %p184
    %p186 = scmp.le.s32.totalorder 1, %s12
    %p187 = scmp.lt.s32.totalorder %s12, 5
    %p188 = pnand %p186, %p187
    %p189 = pneg %p188
    // Predicated region
    $region9: #{memory_forward.1} parent=5 // pred_check
      _
    $region10: #{memory_forward.1} parent=5 // pred_check_branch
      %191 = sbr.rel (%p188) target = $region12
    $region11: #{memory_forward.1} parent=5 // pred_region
      %s192 = ssub.s32 %s12, 1
      // Predicated region
      $region13: #{memory_forward.1} parent=11 // pred_check
        %p193 = pneg %p45
      $region14: #{memory_forward.1} parent=11 // pred_check_branch
        %195 = sbr.rel (%p193) target = $region16
      $region15: #{memory_forward.1} parent=11 // pred_region
        _
      $region16: #{memory_forward.1} parent=11 // pred_fallthru
        _
      // Predicated region
      $region17: #{memory_forward.1} parent=11 // pred_check
        %p196 = pneg %p66
      $region18: #{memory_forward.1} parent=11 // pred_check_branch
        %198 = sbr.rel (%p196) target = $region20
      $region19: #{memory_forward.1} parent=11 // pred_region
        _
      $region20: #{memory_forward.1} parent=11 // pred_fallthru
        _
    $region12: #{memory_forward.1} parent=5 // pred_fallthru
      _
    %p199 = scmp.lt.s32.totalorder %s12, 4
    // Predicated region
    $region21: #{memory_forward.1} parent=5 // pred_check
      %p200 = pneg %p199
    $region22: #{memory_forward.1} parent=5 // pred_check_branch
      %202 = sbr.rel (%p200) target = $region24
    $region23: #{memory_forward.1} parent=5 // pred_region
      // Predicated region
      $region25: #{memory_forward.1} parent=23 // pred_check
        %p203 = pneg %p90
      $region26: #{memory_forward.1} parent=23 // pred_check_branch
        %205 = sbr.rel (%p203) target = $region28
      $region27: #{memory_forward.1} parent=23 // pred_region
        %s206 = smul.u32 %s19, 2
        %s207 = sadd.s32 %s206, %s20
        %s208 = smul.u32 16, %s207
        %p209 = scmp.lt.s32.totalorder %s208, 63
        %s210 = scalar_select %p209, %s208, 63
        %s211 = smul.addr %s210, 8
        %s212 = scalar_lea.vmem %s2, %s211
        %s213 = smul.u32 %s19, 2
        %s214 = sadd.s32 %s213, %s20
        %s215 = smul.u32 16, %s214
      $region28: #{memory_forward.1} parent=23 // pred_fallthru
        _
      // Predicated region
      $region29: #{memory_forward.1} parent=23 // pred_check
        %p216 = pneg %p120
      $region30: #{memory_forward.1} parent=23 // pred_check_branch
        %218 = sbr.rel (%p216) target = $region32
      $region31: #{memory_forward.1} parent=23 // pred_region
        %s219 = smul.u32 %s19, 2
        %s220 = sadd.s32 %s219, %s20
        %p221 = scmp.lt.s32.totalorder %s220, 3
        %s222 = scalar_select %p221, %s220, 3
        %s223 = scalar_lea.vmem %s3, %s222
        %s224 = smul.u32 %s19, 2
        %s225 = sadd.s32 %s224, %s20
      $region32: #{memory_forward.1} parent=23 // pred_fallthru
        _
    $region24: #{memory_forward.1} parent=5 // pred_fallthru
      _
    %p226 = scmp.le.s32.totalorder 1, %s12
    %p227 = scmp.lt.s32.totalorder %s12, 5
    %p228 = pnand %p226, %p227
    %p229 = pneg %p228
    // Predicated region
    $region33: #{memory_forward.1} parent=5 // pred_check
      _
    $region34: #{memory_forward.1} parent=5 // pred_check_branch
      %231 = sbr.rel (%p228) target = $region36
    $region35: #{memory_forward.1} parent=5 // pred_region
      %s232 = ssub.s32 %s12, 1
      %p233 = pneg %p45
      %p234 = pneg %p42
      %p235 = pneg %p66
      %p236 = pneg %p63
      %s237 = smul.u32 %s21, 2
      %s238 = sadd.s32 %s237, %s22
      %s239 = smul.u32 16, %s238
      %p240 = scmp.lt.s32.totalorder %s239, 63
      %s241 = scalar_select %p240, %s239, 63
      %s242 = smul.addr %s241, 8
      %s243 = scalar_lea.vmem %s2, %s242
      %p244 = pneg %p96
      %p245 = pneg %p93
      %s246 = smul.u32 %s21, 2
      %s247 = sadd.s32 %s246, %s22
      %p248 = scmp.lt.s32.totalorder %s247, 3
      %s249 = scalar_select %p248, %s247, 3
      %s250 = scalar_lea.vmem %s3, %s249
      %p251 = pneg %p126
      %p252 = pneg %p123
      %p253 = pneg %p152
      %p254 = pneg %p149
      %p255 = scmp.lt.s32.totalorder %s21, 1
      %s256 = scalar_select %p255, %s21, 1
      %s257 = smul.addr %s256, 8
      %s258 = scalar_lea.vmem %s4, %s257
      %p259 = pneg %p178
      %p260 = pneg %p175
      %p261 = scmp.lt.s32.totalorder %s21, 1
      %s262 = scalar_select %p261, %s21, 1
      %s263 = smul.addr %s262, 8
      %s264 = scalar_lea.vmem %s5, %s263
      %s265 = smul.u32 %s21, 2
      %s266 = sadd.s32 %s265, %s22
      %s267 = smul.u32 16, %s266
      %p268 = scmp.lt.s32.totalorder %s267, 63
      %s269 = scalar_select %p268, %s267, 63
      %s270 = smul.addr %s269, 8
      %s271 = scalar_lea.vmem %s2, %s270
      %s272 = smul.u32 %s21, 2
      %s273 = sadd.s32 %s272, %s22
      %s274 = smul.u32 16, %s273
      %s275 = smul.u32 %s21, 2
      %s276 = sadd.s32 %s275, %s22
      %p277 = scmp.lt.s32.totalorder %s276, 3
      %s278 = scalar_select %p277, %s276, 3
      %s279 = scalar_lea.vmem %s3, %s278
      %s280 = smul.u32 %s21, 2
      %s281 = sadd.s32 %s280, %s22
      %p282 = scmp.lt.s32.totalorder %s21, 1
      %s283 = scalar_select %p282, %s21, 1
      %s284 = smul.addr %s283, 8
      %s285 = scalar_lea.vmem %s4, %s284
      %p286 = scmp.lt.s32.totalorder %s21, 1
      %s287 = scalar_select %p286, %s21, 1
      %s288 = smul.addr %s287, 8
      %s289 = scalar_lea.vmem %s5, %s288
      %p290 = scmp.eq.s32.totalorder %s22, 0
      // Predicated region
      $region37: #{memory_forward.1} parent=35 // pred_check
        %p291 = pneg %p290
      $region38: #{memory_forward.1} parent=35 // pred_check_branch
        %293 = sbr.rel (%p291) target = $region40
      $region39: #{memory_forward.1} parent=35 // pred_region
        %294 = vst [vmem:[%s285] sm:$0xff] -1e+30
        %295 = vst [vmem:[%s289] sm:$0xff] 0.0
      $region40: #{memory_forward.1} parent=35 // pred_fallthru
        _
      %v296 = vld [vmem:[%s0] sm:$0xff]
      %v297 = vld [vmem:[%s271] sm:$0xff]
      %v298 = vld [vmem:[%s271 + $0x8] sm:$0xff]
      %v299 = vld [vmem:[%s271 + $0x10] sm:$0xff]
      %v300 = vld [vmem:[%s271 + $0x18] sm:$0xff]
      %v301 = vld [vmem:[%s271 + $0x20] sm:$0xff]
      %v302 = vld [vmem:[%s271 + $0x28] sm:$0xff]
      %v303 = vld [vmem:[%s271 + $0x30] sm:$0xff]
      %v304 = vld [vmem:[%s271 + $0x38] sm:$0xff]
      %v305 = vld [vmem:[%s271 + $0x40] sm:$0xff]
      %v306 = vld [vmem:[%s271 + $0x48] sm:$0xff]
      %v307 = vld [vmem:[%s271 + $0x50] sm:$0xff]
      %v308 = vld [vmem:[%s271 + $0x58] sm:$0xff]
      %v309 = vld [vmem:[%s271 + $0x60] sm:$0xff]
      %v310 = vld [vmem:[%s271 + $0x68] sm:$0xff]
      %v311 = vld [vmem:[%s271 + $0x70] sm:$0xff]
      %v312 = vld [vmem:[%s271 + $0x78] sm:$0xff]
      %vm313 = vcmask 523264
      %v315 = vsel %vm313, %v296, 0
      %v318 = vsel %vm313, %v297, 0
      %v321 = vsel %vm313, %v298, 0
      %v324 = vsel %vm313, %v299, 0
      %v327 = vsel %vm313, %v300, 0
      %v330 = vsel %vm313, %v301, 0
      %v333 = vsel %vm313, %v302, 0
      %v336 = vsel %vm313, %v303, 0
      %v339 = vsel %vm313, %v304, 0
      %v342 = vsel %vm313, %v305, 0
      %v345 = vsel %vm313, %v306, 0
      %v348 = vsel %vm313, %v307, 0
      %v351 = vsel %vm313, %v308, 0
      %v354 = vsel %vm313, %v309, 0
      %v357 = vsel %vm313, %v310, 0
      %v360 = vsel %vm313, %v311, 0
      %v363 = vsel %vm313, %v312, 0
      %365 = vmatprep.subr.mxu0 0.0
      %366 = vmatpush1.xpose.msra.mxu0 %v363
      %367 = vmatprep.subr.mxu0 0.0
      %368 = vmatpush1.xpose.msra.mxu0 %v360
      %369 = vmatprep.subr.mxu0 0.0
      %370 = vmatpush1.xpose.msra.mxu0 %v357
      %371 = vmatprep.subr.mxu0 0.0
      %372 = vmatpush1.xpose.msra.mxu0 %v354
      %373 = vmatprep.subr.mxu0 0.0
      %374 = vmatpush1.xpose.msra.mxu0 %v351
      %375 = vmatprep.subr.mxu0 0.0
      %376 = vmatpush1.xpose.msra.mxu0 %v348
      %377 = vmatprep.subr.mxu0 0.0
      %378 = vmatpush1.xpose.msra.mxu0 %v345
      %379 = vmatprep.subr.mxu0 0.0
      %380 = vmatpush1.xpose.msra.mxu0 %v342
      %381 = vmatprep.subr.mxu0 0.0
      %382 = vmatpush1.xpose.msra.mxu0 %v339
      %383 = vmatprep.subr.mxu0 0.0
      %384 = vmatpush1.xpose.msra.mxu0 %v336
      %385 = vmatprep.subr.mxu0 0.0
      %386 = vmatpush1.xpose.msra.mxu0 %v333
      %387 = vmatprep.subr.mxu0 0.0
      %388 = vmatpush1.xpose.msra.mxu0 %v330
      %389 = vmatprep.subr.mxu0 0.0
      %390 = vmatpush1.xpose.msra.mxu0 %v327
      %391 = vmatprep.subr.mxu0 0.0
      %392 = vmatpush1.xpose.msra.mxu0 %v324
      %393 = vmatprep.subr.mxu0 0.0
      %394 = vmatpush1.xpose.msra.mxu0 %v321
      %395 = vmatprep.subr.mxu0 0.0
      %396 = vmatpush1.xpose.msra.mxu0 %v318
      %397 = vmatprep.subr.mxu0 0.0
      %398 = vmatpush2.xpose.msra.mxu0 0.0
      %399 = vmatprep.subr.mxu0 0.0
      %400 = vmatpush2.xpose.msra.mxu0 0.0
      %401 = vmatprep.subr.mxu0 0.0
      %402 = vmatpush2.xpose.msra.mxu0 0.0
      %403 = vmatprep.subr.mxu0 0.0
      %404 = vmatpush2.xpose.msra.mxu0 0.0
      %405 = vmatprep.subr.mxu0 0.0
      %406 = vmatpush2.xpose.msra.mxu0 0.0
      %407 = vmatprep.subr.mxu0 0.0
      %408 = vmatpush2.xpose.msra.mxu0 0.0
      %409 = vmatprep.subr.mxu0 0.0
      %410 = vmatpush2.xpose.msra.mxu0 0.0
      %411 = vmatprep.subr.mxu0 0.0
      %412 = vmatpush2.xpose.msra.mxu0 0.0
      %413 = vmatprep.subr.mxu0 0.0
      %414 = vmatpush2.xpose.msra.mxu0 0.0
      %415 = vmatprep.subr.mxu0 0.0
      %416 = vmatpush2.xpose.msra.mxu0 0.0
      %417 = vmatprep.subr.mxu0 0.0
      %418 = vmatpush2.xpose.msra.mxu0 0.0
      %419 = vmatprep.subr.mxu0 0.0
      %420 = vmatpush2.xpose.msra.mxu0 0.0
      %421 = vmatprep.subr.mxu0 0.0
      %422 = vmatpush2.xpose.msra.mxu0 0.0
      %423 = vmatprep.subr.mxu0 0.0
      %424 = vmatpush2.xpose.msra.mxu0 0.0
      %425 = vmatprep.subr.mxu0 0.0
      %426 = vmatpush2.xpose.msra.mxu0 0.0
      %427 = vmatprep.subr.mxu0 0.0
      %428 = vmatpush2.xpose.msra.mxu0 0.0
      %429 = vmatprep.mubr.f32.mxu0 0.0
      %430 = vmatmul.mubr.f32.gmra.mxu0 %v315
      %v431 = vpop.f32.mrf.mxu0
      %v432 = vadd.f32 0.0, %v431
      %v433 = vpop.f32.mrf.mxu0
      %434 = vdwg.mxu0
      %v435 = vld [vmem:[%s279] sm:$0x1]
      %v436 = vld [vmem:[%s1] sm:$0xff]
      %v437 = vlaneseq
      %v438 = vshrl.u32 %v437, 7
      %v439 = vsub.s32 0, %v438
      %v440 = vrot.slane %v435, %v439
      %441 = vset.pattern.permute.xlu0 0
      %442 = vperm.xlu0 %441, %v436
      %v443 = vpop.permute.xlu0 %442
      %vm444 = vcmp.ne.s32.totalorder %v440, %v443
      %v445 = vmul.f32 %v432, 14.285714
      %v446 = vsel %vm444, 0.0, -1e+30
      %v447 = vadd.f32 %v445, %v446
      %v448 = vld [vmem:[%s285] sm:$0xff]
      %v449 = vld [vmem:[%s289] sm:$0xff]
      %v450 = vmax.f32 %v448, %v447
      %v451 = vsub.f32 %v448, %v450
      %v452 = vmul.f32 %v451, 1.442695
      %v453 = vpow.pop %v452
      %v454 = vmul.f32 %v449, %v453
      %v455 = vsub.f32 %v447, %v450
      %v456 = vmul.f32 %v455, 1.442695
      %v457 = vpow.pop %v456
      %v458 = vadd.f32 %v454, %v457
      %459 = vst [vmem:[%s285] sm:$0xff] %v450
      %460 = vst [vmem:[%s289] sm:$0xff] %v458
      %p461 = scmp.lt.s32.totalorder %s21, 1
      %s462 = scalar_select %p461, %s21, 1
      %s463 = smul.addr %s462, 8
      %s464 = scalar_lea.vmem %s4, %s463
      %p465 = scmp.lt.s32.totalorder %s21, 1
      %s466 = scalar_select %p465, %s21, 1
      %s467 = smul.addr %s466, 8
      %s468 = scalar_lea.vmem %s5, %s467
      // Predicated region
      $region41: #{memory_forward.1} parent=35 // pred_check
        %p469 = pneg %p149
      $region42: #{memory_forward.1} parent=35 // pred_check_branch
        %471 = sbr.rel (%p469) target = $region44
      $region43: #{memory_forward.1} parent=35 // pred_region
        _
      $region44: #{memory_forward.1} parent=35 // pred_fallthru
        _
      // Predicated region
      $region45: #{memory_forward.1} parent=35 // pred_check
        %p472 = pneg %p175
      $region46: #{memory_forward.1} parent=35 // pred_check_branch
        %474 = sbr.rel (%p472) target = $region48
      $region47: #{memory_forward.1} parent=35 // pred_region
        _
      $region48: #{memory_forward.1} parent=35 // pred_fallthru
        _
    $region36: #{memory_forward.1} parent=5 // pred_fallthru
      _
    %p475 = scmp.le.s32.totalorder 2, %s12
    // Predicated region
    $region49: #{memory_forward.1} parent=5 // pred_check
      %p476 = pneg %p475
    $region50: #{memory_forward.1} parent=5 // pred_check_branch
      %478 = sbr.rel (%p476) target = $region52
    $region51: #{memory_forward.1} parent=5 // pred_region
      %s479 = ssub.s32 %s12, 2
      // Predicated region
      $region53: #{memory_forward.1} parent=51 // pred_check
        %p480 = pneg %p155
      $region54: #{memory_forward.1} parent=51 // pred_check_branch
        %482 = sbr.rel (%p480) target = $region56
      $region55: #{memory_forward.1} parent=51 // pred_region
        %p483 = scmp.lt.s32.totalorder %s23, 1
        %s484 = scalar_select %p483, %s23, 1
        %s485 = smul.addr %s484, 8
        %s486 = scalar_lea.vmem %s4, %s485
      $region56: #{memory_forward.1} parent=51 // pred_fallthru
        _
      // Predicated region
      $region57: #{memory_forward.1} parent=51 // pred_check
        %p487 = pneg %p181
      $region58: #{memory_forward.1} parent=51 // pred_check_branch
        %489 = sbr.rel (%p487) target = $region60
      $region59: #{memory_forward.1} parent=51 // pred_region
        %p490 = scmp.lt.s32.totalorder %s23, 1
        %s491 = scalar_select %p490, %s23, 1
        %s492 = smul.addr %s491, 8
        %s493 = scalar_lea.vmem %s5, %s492
      $region60: #{memory_forward.1} parent=51 // pred_fallthru
        _
    $region52: #{memory_forward.1} parent=5 // pred_fallthru
      _
  $region6: #{memory_forward.1} parent=0 // loop_footer
    %s16 = sadd.s32 1, %s12
  $region7: #{memory_forward.1} parent=0 // loop_footer_branch
    %11 = sbr.rel target = $region3
  $region8: #{memory_forward.1} parent=0 // loop_exit
    _

</llo_original>
